<compile_context>
chip_gen: v5e
topology: v5e:2x2
jax: 0.10.0
libtpu: 0.0.40
codegen_flags: <defaults>
</compile_context>

<pallas_src>
import jax
import jax.numpy as jnp
from jax.experimental import pallas as pl
from jax.experimental.pallas import tpu as pltpu


def _round_up(x, m):
    return (x + m - 1) // m * m


def _vmem_capacity_bytes():
    try:
        cap = int(pltpu.get_tpu_info().vmem_capacity_bytes)
        return min(max(cap, 16 << 20), 128 << 20)
    except Exception:
        return 64 << 20  # conservative (v7x per-TensorCore)


_VMEM_CAP = _vmem_capacity_bytes()
# Keep the scoped limit well below physical capacity so double-buffering stays
# alive even if the info API reports per-chip (not per-TensorCore) capacity.
_VMEM_LIMIT = min((_VMEM_CAP * 3) // 4, 96 << 20)


def _choose_tile_m(M, Kpp, Cp, pack, y_bytes):
    """Pick the M tile (in un-packed output rows) and the padded M.

    Double-buffered working set per tile:
        2 * (tile_prows * Kpp * 2  +  tile_prows * Cp * y_bytes)  +  2*Kpp*Cp*2
    is budgeted against min(VMEM/2, 32 MiB) (hardened for v7x's 64 MiB/TC).
    """
    g = 8 * pack                                  # sublane granularity (unpacked rows)
    budget = min(_VMEM_CAP // 2, 32 << 20)
    per_prow = 2 * (Kpp * 2 + Cp * y_bytes)
    fixed = 2 * Kpp * Cp * 2 + (256 << 10)
    tm_max = max((budget - fixed) // per_prow, 8) * pack
    tm_max = min(tm_max, 8192)
    tm_max = max((tm_max // g) * g, g)

    Mp_min = _round_up(M, pack)
    if Mp_min <= tm_max and M < 2048:
        return Mp_min, Mp_min                     # single full-extent tile

    # Prefer >= 2 tiles when there is enough work so the "parallel" axis can
    # shard across both TensorCores on v7x.
    n_pref = 2 if M >= 2048 else 1
    tm = min(tm_max, _round_up(-(-M // n_pref), g))
    tm = max(_round_up(tm, g), g)
    # Prefer a tile that divides M exactly (Mp == M: no pad rows, no trailing
    # slice copy); search downward at g granularity within a factor of 2.
    cand = tm
    while cand >= max(g, tm // 2):
        if M % cand == 0:
            tm = cand
            break
        cand -= g
    return tm, _round_up(M, tm)


# ---------------------------------------------------------------------------
# Kernels
# ---------------------------------------------------------------------------

def _conv_stats_kernel(p_ref, w_ref, y_ref, psum_ref, psq_ref):
    # One M-tile of the (row-pair packed) im2col GEMM on the MXU.
    # bf16 operands, f32 accumulate; output stored lane-dense in bf16.
    acc = jnp.dot(p_ref[...], w_ref[...], preferred_element_type=jnp.float32)
    # Per-tile partial BatchNorm statistics from the f32 accumulator.
    psum_ref[...] = jnp.sum(acc, axis=0).reshape(psum_ref.shape)
    psq_ref[...] = jnp.sum(acc * acc, axis=0).reshape(psq_ref.shape)
    y_ref[...] = acc.astype(y_ref.dtype)


def _bn_relu_kernel(y_ref, scale_ref, shift_ref, o_ref):
    y = y_ref[...].astype(jnp.float32) * scale_ref[...] + shift_ref[...]
    o_ref[...] = jnp.maximum(y, 0.0).astype(o_ref.dtype)


# ---------------------------------------------------------------------------
# ConvBNReLU layer
# ---------------------------------------------------------------------------

def conv_bn_relu(x_nhwc, w_oihw, gamma, beta, *, stride, padding,
                 eps=1e-5, out_dtype=jnp.bfloat16):
    """One ConvBNReLU layer. x_nhwc: (N,H,W,Cin); w_oihw: (Cout,Cin,KH,KW)."""
    N, H, W, Cin = x_nhwc.shape
    Cout, _, KH, KW = w_oihw.shape
    Ho = (H + 2 * padding - KH) // stride + 1
    Wo = (W + 2 * padding - KW) // stride + 1
    M = N * Ho * Wo
    K = KH * KW * Cin

    # Row-pair packing factor so all stores are lane-dense (last dim == 128)
    # for Cout < 128, without any in-kernel relayout.
    pack = 128 // Cout if (Cout < 128 and 128 % Cout == 0) else 1

    # ---- glue (plain JAX): im2col directly in bf16 --------------------------
    xb = x_nhwc.astype(jnp.bfloat16)
    if KH == 1 and KW == 1 and padding == 0 and stride == 1:
        patches = xb.reshape(M, K)                     # 1x1 conv: no im2col copy
    else:
        xp = jnp.pad(xb, ((0, 0), (padding, padding), (padding, padding), (0, 0)))
        cols = [xp[:, kh:kh + Ho * stride:stride, kw:kw + Wo * stride:stride, :]
                for kh in range(KH) for kw in range(KW)]
        # column index = (kh*KW + kw)*Cin + cin
        patches = jnp.concatenate(cols, axis=-1).reshape(M, K)
    # TODO(synk): implicit GEMM would eliminate this KH*KW im2col blow-up.

    # Pad K only to 64 (not 128): blocks span the full K extent so lane
    # alignment is not required; pack*Kp stays MXU-friendly (x128 or 64).
    Kp = _round_up(K, 64)
    # weight (Cout,Cin,KH,KW) -> (KH,KW,Cin,Cout) -> (K, Cout)  (same tap order)
    wmat = jnp.transpose(w_oihw, (2, 3, 1, 0)).reshape(K, Cout)
    wmat = jnp.pad(wmat, ((0, Kp - K), (0, 0))).astype(jnp.bfloat16)
    if pack > 1:
        # Block-diagonal weight: a packed LHS row holds `pack` consecutive
        # im2col rows, so the GEMM emits their outputs side by side in the
        # lane dim -> lane-dense (x, 128) result straight off the MXU.  The
        # zero blocks occupy lanes that were N-padding anyway (Cout < 128).
        wmat = jnp.kron(jnp.eye(pack, dtype=wmat.dtype), wmat)
    Kpp = pack * Kp
    Cp = pack * Cout

    tm, Mp = _choose_tile_m(M, Kpp, Cp, pack, 2)
    patches = jnp.pad(patches, ((0, Mp - M), (0, Kp - K)))
    patches = patches.reshape(Mp // pack, Kpp)         # row-pair packing (free)
    n_tiles = Mp // tm
    tr = tm // pack                                    # packed rows per tile

    # ---- pass 1: tiled MXU GEMM + per-tile partial BN statistics ------------
    cost1 = pl.CostEstimate(
        flops=2 * (Mp // pack) * Kpp * Cp,
        transcendentals=0,
        bytes_accessed=((Mp // pack) * Kpp * 2 + Kpp * Cp * 2
                        + (Mp // pack) * Cp * 2 + 2 * n_tiles * Cp * 4),
    )
    conv_p, psum, psq = pl.pallas_call(
        _conv_stats_kernel,
        grid=(n_tiles,),
        in_specs=[
            pl.BlockSpec((tr, Kpp), lambda i: (i, 0)),
            pl.BlockSpec((Kpp, Cp), lambda i: (0, 0)),
        ],
        out_specs=(
            pl.BlockSpec((tr, Cp), lambda i: (i, 0)),
            pl.BlockSpec((1, 1, Cp), lambda i: (i, 0, 0)),
            pl.BlockSpec((1, 1, Cp), lambda i: (i, 0, 0)),
        ),
        out_shape=(
            jax.ShapeDtypeStruct((Mp // pack, Cp), jnp.bfloat16),
            jax.ShapeDtypeStruct((n_tiles, 1, Cp), jnp.float32),
            jax.ShapeDtypeStruct((n_tiles, 1, Cp), jnp.float32),
        ),
        compiler_params=pltpu.CompilerParams(
            dimension_semantics=("parallel",),
            vmem_limit_bytes=_VMEM_LIMIT,
        ),
        cost_estimate=cost1,
    )(patches, wmat)

    # ---- tiny JAX reduction -> BN constants (training-mode batch stats) -----
    # Zero pad rows / zero pad-K columns contribute nothing to the sums, so
    # dividing by the true M keeps the statistics exact.
    ps = jnp.sum(psum, axis=(0, 1))
    sq = jnp.sum(psq, axis=(0, 1))
    if pack > 1:
        ps = ps.reshape(pack, Cout).sum(axis=0)
        sq = sq.reshape(pack, Cout).sum(axis=0)
    mean = ps / M
    # TODO(synk): E[x^2]-mean^2 in f32 can cancel for very large M with large
    # per-channel means; a shifted-sum / Welford merge of the per-tile
    # partials would be more robust.
    var = jnp.maximum(sq / M - mean * mean, 0.0)       # biased variance (PyTorch fwd)
    scale = gamma * jax.lax.rsqrt(var + eps)
    shift = beta - mean * scale
    scale_p = jnp.tile(scale, pack).reshape(1, Cp)
    shift_p = jnp.tile(shift, pack).reshape(1, Cp)

    # ---- pass 2: fused (scale*x + shift) + ReLU, lane-dense in/out -----------
    out_bytes = jnp.dtype(out_dtype).itemsize
    cost2 = pl.CostEstimate(
        flops=3 * (Mp // pack) * Cp,
        transcendentals=0,
        bytes_accessed=(Mp // pack) * Cp * (2 + out_bytes) + 2 * Cp * 4,
    )
    out_p = pl.pallas_call(
        _bn_relu_kernel,
        grid=(n_tiles,),
        in_specs=[
            pl.BlockSpec((tr, Cp), lambda i: (i, 0)),
            pl.BlockSpec((1, Cp), lambda i: (0, 0)),
            pl.BlockSpec((1, Cp), lambda i: (0, 0)),
        ],
        out_specs=pl.BlockSpec((tr, Cp), lambda i: (i, 0)),
        out_shape=jax.ShapeDtypeStruct((Mp // pack, Cp), out_dtype),
        compiler_params=pltpu.CompilerParams(
            dimension_semantics=("parallel",),
            vmem_limit_bytes=_VMEM_LIMIT,
        ),
        cost_estimate=cost2,
    )(conv_p, scale_p, shift_p)

    # Undo row-pair packing (row-major reshape, essentially free) and padding.
    out = out_p.reshape(Mp, Cout)
    if Mp != M:
        out = out[:M]
    return out.reshape(N, Ho, Wo, Cout)


# ---------------------------------------------------------------------------
# SpatialPath module
# ---------------------------------------------------------------------------

def init_spatial_path_params(key):
    """Deterministic synthetic init matching the PyTorch module's shapes.

    Conv weights: kaiming_normal_(a=1) => std = 1/sqrt(fan_in), no bias.
    BatchNorm2d defaults: gamma = 1, beta = 0.
    """
    cfgs = [
        ("conv1", 3, 64, 7, 2, 3),
        ("conv2", 64, 64, 3, 2, 1),
        ("conv3", 64, 64, 3, 2, 1),
        ("conv_out", 64, 128, 1, 1, 0),
    ]
    keys = jax.random.split(key, len(cfgs))
    params = {}
    for k, (name, cin, cout, ksz, s, p) in zip(keys, cfgs):
        fan_in = cin * ksz * ksz
        std = 1.0 / jnp.sqrt(jnp.float32(fan_in))  # gain(leaky_relu, a=1) == 1
        w = jax.random.normal(k, (cout, cin, ksz, ksz), jnp.float32) * std
        params[name] = dict(
            w=w,
            gamma=jnp.ones((cout,), jnp.float32),
            beta=jnp.zeros((cout,), jnp.float32),
            stride=s,
            padding=p,
        )
    return params


def spatial_path(x_nchw, params):
    """SpatialPath.forward.  Input NCHW, output NCHW f32 (like PyTorch)."""
    x = jnp.transpose(x_nchw, (0, 2, 3, 1))  # NCHW -> NHWC for the kernels
    names = ("conv1", "conv2", "conv3", "conv_out")
    for i, name in enumerate(names):
        p = params[name]
        # bf16 intermediates between layers; f32 for the final output.
        out_dtype = jnp.float32 if i == len(names) - 1 else jnp.bfloat16
        x = conv_bn_relu(x, p["w"], p["gamma"], p["beta"],
                         stride=p["stride"], padding=p["padding"],
                         out_dtype=out_dtype)
    return jnp.transpose(x, (0, 3, 1, 2))  # NHWC -> NCHW


if __name__ == "__main__":
    key = jax.random.PRNGKey(0)
    kx, kp = jax.random.split(key)
    x = jax.random.normal(kx, (2, 3, 16, 16), jnp.float32)  # NCHW, like PyTorch
    params = init_spatial_path_params(kp)

    out = spatial_path(x, params)
    out = jax.block_until_ready(out)

    # 16 -> 8 -> 4 -> 2 spatial, 128 channels at the end.
    assert out.shape == (2, 128, 2, 2), out.shape
    assert out.dtype == jnp.float32
    assert bool(jnp.all(jnp.isfinite(out)))
    print("KERNEL_OK")
</pallas_src>

<mosaic_0001>
module attributes {stable_mosaic.version = 11 : i64} {
  func.func @_conv_stats_kernel(%arg0: i32, %arg1: memref<64x384xbf16, #tpu.memory_space<vmem>>, %arg2: memref<384x128xbf16, #tpu.memory_space<vmem>>, %arg3: memref<64x128xbf16, #tpu.memory_space<vmem>>, %arg4: memref<1x1x128xf32, #tpu.memory_space<vmem>>, %arg5: memref<1x1x128xf32, #tpu.memory_space<vmem>>) attributes {dimension_semantics = [#tpu.dimension_semantics<parallel>], iteration_bounds = array<i64: 1>, scalar_prefetch = 0 : i64, scratch_operands = 0 : i64, tpu.core_type = #tpu.core_type<tc>, window_params = [{transform_indices = @transform_0, window_bounds = array<i64: 64, 384>}, {pipeline_mode = #tpu.pipeline_mode<synchronous>, transform_indices = @transform_1, window_bounds = array<i64: 384, 128>}, {transform_indices = @transform_2, window_bounds = array<i64: 64, 128>}, {transform_indices = @transform_3, window_bounds = array<i64: 1, 1, 128>}, {transform_indices = @transform_4, window_bounds = array<i64: 1, 1, 128>}]} {
    %c0 = arith.constant 0 : index
    %c0_0 = arith.constant 0 : index
    %0 = vector.load %arg1[%c0, %c0_0] : memref<64x384xbf16, #tpu.memory_space<vmem>>, vector<64x384xbf16>
    %c0_1 = arith.constant 0 : index
    %c0_2 = arith.constant 0 : index
    %1 = vector.load %arg2[%c0_1, %c0_2] : memref<384x128xbf16, #tpu.memory_space<vmem>>, vector<384x128xbf16>
    %cst = arith.constant dense<0.000000e+00> : vector<64x128xf32>
    %2 = tpu.matmul %0, %1, %cst {dimension_numbers = #tpu.dot_dimension_numbers<[1], [0], [0], [1], [0, 0, 1, 1], [], []>} : vector<64x384xbf16>, vector<384x128xbf16>, vector<64x128xf32> -> vector<64x128xf32>
    %cst_3 = arith.constant dense<0.000000e+00> : vector<128xf32>
    %3 = vector.multi_reduction <add>, %2, %cst_3 [0] : vector<64x128xf32> to vector<128xf32>
    %4 = vector.shape_cast %3 : vector<128xf32> to vector<1x1x128xf32>
    %c0_4 = arith.constant 0 : index
    %c0_5 = arith.constant 0 : index
    %c0_6 = arith.constant 0 : index
    %5 = vector.load %arg4[%c0_4, %c0_5, %c0_6] : memref<1x1x128xf32, #tpu.memory_space<vmem>>, vector<1x1x128xf32>
    tpu.vector_store %arg4[%c0_4, %c0_5, %c0_6], %4 {strides = array<i32>} : memref<1x1x128xf32, #tpu.memory_space<vmem>>, vector<1x1x128xf32>,
    %6 = arith.mulf %2, %2 : vector<64x128xf32>
    %cst_7 = arith.constant dense<0.000000e+00> : vector<128xf32>
    %7 = vector.multi_reduction <add>, %6, %cst_7 [0] : vector<64x128xf32> to vector<128xf32>
    %8 = vector.shape_cast %7 : vector<128xf32> to vector<1x1x128xf32>
    %c0_8 = arith.constant 0 : index
    %c0_9 = arith.constant 0 : index
    %c0_10 = arith.constant 0 : index
    %9 = vector.load %arg5[%c0_8, %c0_9, %c0_10] : memref<1x1x128xf32, #tpu.memory_space<vmem>>, vector<1x1x128xf32>
    tpu.vector_store %arg5[%c0_8, %c0_9, %c0_10], %8 {strides = array<i32>} : memref<1x1x128xf32, #tpu.memory_space<vmem>>, vector<1x1x128xf32>,
    %10 = arith.truncf %2 : vector<64x128xf32> to vector<64x128xbf16>
    %c0_11 = arith.constant 0 : index
    %c0_12 = arith.constant 0 : index
    %11 = vector.load %arg3[%c0_11, %c0_12] : memref<64x128xbf16, #tpu.memory_space<vmem>>, vector<64x128xbf16>
    tpu.vector_store %arg3[%c0_11, %c0_12], %10 {strides = array<i32>} : memref<64x128xbf16, #tpu.memory_space<vmem>>, vector<64x128xbf16>,
    return
  }
  func.func @transform_0(%arg0: i32) -> (i32, i32) {
    %c0_i32 = arith.constant 0 : i32
    %c0_i32_0 = arith.constant 0 : i32
    return %arg0, %c0_i32 : i32, i32
  }
  func.func @transform_1(%arg0: i32) -> (i32, i32) {
    %c0_i32 = arith.constant 0 : i32
    %c0_i32_0 = arith.constant 0 : i32
    %c0_i32_1 = arith.constant 0 : i32
    return %c0_i32, %c0_i32_0 : i32, i32
  }
  func.func @transform_2(%arg0: i32) -> (i32, i32) {
    %c0_i32 = arith.constant 0 : i32
    %c0_i32_0 = arith.constant 0 : i32
    return %arg0, %c0_i32 : i32, i32
  }
  func.func @transform_3(%arg0: i32) -> (i32, i32, i32) {
    %c0_i32 = arith.constant 0 : i32
    %c0_i32_0 = arith.constant 0 : i32
    %c0_i32_1 = arith.constant 0 : i32
    return %arg0, %c0_i32, %c0_i32_0 : i32, i32, i32
  }
  func.func @transform_4(%arg0: i32) -> (i32, i32, i32) {
    %c0_i32 = arith.constant 0 : i32
    %c0_i32_0 = arith.constant 0 : i32
    %c0_i32_1 = arith.constant 0 : i32
    return %arg0, %c0_i32, %c0_i32_0 : i32, i32, i32
  }
}

</mosaic_0001>

<llo_original>
// kernel: tpu_custom_call.1
$region0: #{tpu_custom_call.1}
  #allocation0 [shape = 'u32[]', space=smem, size = 0x4, offset = 0x4, fixed_abs, tag = 'smem constant byte address 0x4 - core index']
  #allocation1 [shape = 'u32[72,128]{1,0:T(1,128)}', space=vmem, size = 0x9000, scoped, tag = 'internal scratch']
  %s0 = inlined_call_operand.hbm [shape: bf16[64,384], index: 0, kind: input, shape index: {}]
  %s1 = inlined_call_operand.hbm [shape: bf16[384,128], index: 1, kind: input, shape index: {}]
  %s2 = inlined_call_operand.hbm [shape: bf16[64,128], index: 2, kind: output, shape index: {0}]
  %s3 = inlined_call_operand.hbm [shape: f32[1,1,128], index: 3, kind: output, shape index: {1}]
  %s4 = inlined_call_operand.hbm [shape: f32[1,1,128], index: 4, kind: output, shape index: {2}]
  %5 = xla_tuple %s2, %s3, %s4
  %s6 = sld [smem:[#allocation0]]
  $region42: #{tpu_custom_call.1} parent=0
    _
  %s8 = ssub.s32 1, %s6
  %s9 = scalar_select 0, %s8, %s6
  $region1: #{tpu_custom_call.1} parent=0
    #allocation2 [shape = 'u8[49152]{0}', space=vmem, size = 0xc000, scoped, tag = 'input window, operand 0, single buffered']
    #allocation3 [shape = 's32[1]{0}', space=sflag, size = 0x4, scoped, tag = 'scoped memory for tpu_custom_call.1']
    #allocation4 [shape = 's32[1]{0}', space=sflag, size = 0x4, scoped, tag = 'scoped memory for tpu_custom_call.1']
    #allocation5 [shape = 'u8[98304]{0}', space=vmem, size = 0x18000, scoped, tag = 'input window, operand 1, single buffered']
    #allocation6 [shape = 's32[1]{0}', space=sflag, size = 0x4, scoped, tag = 'scoped memory for tpu_custom_call.1']
    #allocation7 [shape = 'u8[16384]{0}', space=vmem, size = 0x4000, scoped, tag = 'output window, operand 0, single buffered']
    #allocation8 [shape = 'u8[512]{0}', space=vmem, size = 0x400, scoped, tag = 'output window, operand 1, single buffered']
    #allocation9 [shape = 's32[1]{0}', space=sflag, size = 0x4, scoped, tag = 'scoped memory for tpu_custom_call.1']
    #allocation10 [shape = 'u8[512]{0}', space=vmem, size = 0x400, scoped, tag = 'output window, operand 2, single buffered']
    %10 = vsyncpa [#allocation3], 0
    %11 = vsyncpa [#allocation6], 0
    %12 = vsyncpa [#allocation4], 0
    %13 = vsyncpa [#allocation9], 0
    // Predicated region
    $region2: #{tpu_custom_call.1} parent=1 // pred_check
      _
    $region3: #{tpu_custom_call.1} parent=1 // pred_check_branch
      %15 = sbr.rel (0) target = $region5
    $region4: #{tpu_custom_call.1} parent=1 // pred_region
      %17 = vsyncadd [#allocation3], 0
      %s18 = sshll.u32 %s0, 4
      %s19 = int_to_ptr.hbm [resolvable:$true] %s18
      %s20 = sshll.u32 [#allocation2], 4
      %s21 = int_to_ptr.vmem [resolvable:$true] %s20
      %26 = dma.hbm_to_vmem [thread:$0]  %s19, 1536, %s21, [#allocation3], 192, 192, 12
    $region5: #{tpu_custom_call.1} parent=1 // pred_fallthru
      _
    // Predicated region
    $region6: #{tpu_custom_call.1} parent=1 // pred_check
      _
    $region7: #{tpu_custom_call.1} parent=1 // pred_check_branch
      %28 = sbr.rel (0) target = $region9
    $region8: #{tpu_custom_call.1} parent=1 // pred_region
      %30 = vsyncadd [#allocation6], 0
      %s31 = sshll.u32 %s1, 4
      %s32 = int_to_ptr.hbm [resolvable:$true] %s31
      %s33 = sshll.u32 [#allocation5], 4
      %s34 = int_to_ptr.vmem [resolvable:$true] %s33
      %39 = dma.hbm_to_vmem [thread:$0]  %s32, 3072, %s34, [#allocation6], 64, 64, 4
    $region9: #{tpu_custom_call.1} parent=1 // pred_fallthru
      _
    // Predicated region
    $region10: #{tpu_custom_call.1} parent=1 // pred_check
      _
    $region11: #{tpu_custom_call.1} parent=1 // pred_check_branch
      %41 = sbr.rel (0) target = $region13
    $region12: #{tpu_custom_call.1} parent=1 // pred_region
      %43 = dma.done [#allocation3], 1536
    $region13: #{tpu_custom_call.1} parent=1 // pred_fallthru
      _
    // Predicated region
    $region14: #{tpu_custom_call.1} parent=1 // pred_check
      _
    $region15: #{tpu_custom_call.1} parent=1 // pred_check_branch
      %45 = sbr.rel (0) target = $region17
    $region16: #{tpu_custom_call.1} parent=1 // pred_region
      %47 = dma.done [#allocation6], 3072
    $region17: #{tpu_custom_call.1} parent=1 // pred_fallthru
      _
    %v48 = vld [vmem:[#allocation2] sm:$0xff]
    %v49 = vld [vmem:[#allocation2 + $0x8] sm:$0xf]
    %v50 = vld [vmem:[#allocation2 + $0xc] sm:$0xff]
    %v51 = vld [vmem:[#allocation2 + $0x14] sm:$0xf]
    %v52 = vld [vmem:[#allocation2 + $0x18] sm:$0xff]
    %v53 = vld [vmem:[#allocation2 + $0x20] sm:$0xf]
    %v54 = vld [vmem:[#allocation2 + $0x24] sm:$0xff]
    %v55 = vld [vmem:[#allocation2 + $0x2c] sm:$0xf]
    %v56 = vld [vmem:[#allocation2 + $0x30] sm:$0xff]
    %v57 = vld [vmem:[#allocation2 + $0x38] sm:$0xf]
    %v58 = vld [vmem:[#allocation2 + $0x3c] sm:$0xff]
    %v59 = vld [vmem:[#allocation2 + $0x44] sm:$0xf]
    %v60 = vld [vmem:[#allocation2 + $0x48] sm:$0xff]
    %v61 = vld [vmem:[#allocation2 + $0x50] sm:$0xf]
    %v62 = vld [vmem:[#allocation2 + $0x54] sm:$0xff]
    %v63 = vld [vmem:[#allocation2 + $0x5c] sm:$0xf]
    %v64 = vld [vmem:[#allocation5] sm:$0xf]
    %v65 = vld [vmem:[#allocation5 + $0x4] sm:$0xf]
    %v66 = vld [vmem:[#allocation5 + $0x8] sm:$0xf]
    %v67 = vld [vmem:[#allocation5 + $0xc] sm:$0xf]
    %v68 = vld [vmem:[#allocation5 + $0x10] sm:$0xf]
    %v69 = vld [vmem:[#allocation5 + $0x14] sm:$0xf]
    %v70 = vld [vmem:[#allocation5 + $0x18] sm:$0xf]
    %v71 = vld [vmem:[#allocation5 + $0x1c] sm:$0xf]
    %v72 = vld [vmem:[#allocation5 + $0x20] sm:$0xf]
    %v73 = vld [vmem:[#allocation5 + $0x24] sm:$0xf]
    %v74 = vld [vmem:[#allocation5 + $0x28] sm:$0xf]
    %v75 = vld [vmem:[#allocation5 + $0x2c] sm:$0xf]
    %v76 = vld [vmem:[#allocation5 + $0x30] sm:$0xf]
    %v77 = vld [vmem:[#allocation5 + $0x34] sm:$0xf]
    %v78 = vld [vmem:[#allocation5 + $0x38] sm:$0xf]
    %v79 = vld [vmem:[#allocation5 + $0x3c] sm:$0xf]
    %v80 = vld [vmem:[#allocation5 + $0x40] sm:$0xf]
    %v81 = vld [vmem:[#allocation5 + $0x44] sm:$0xf]
    %v82 = vld [vmem:[#allocation5 + $0x48] sm:$0xf]
    %v83 = vld [vmem:[#allocation5 + $0x4c] sm:$0xf]
    %v84 = vld [vmem:[#allocation5 + $0x50] sm:$0xf]
    %v85 = vld [vmem:[#allocation5 + $0x54] sm:$0xf]
    %v86 = vld [vmem:[#allocation5 + $0x58] sm:$0xf]
    %v87 = vld [vmem:[#allocation5 + $0x5c] sm:$0xf]
    %v88 = vld [vmem:[#allocation5 + $0x60] sm:$0xf]
    %v89 = vld [vmem:[#allocation5 + $0x64] sm:$0xf]
    %v90 = vld [vmem:[#allocation5 + $0x68] sm:$0xf]
    %v91 = vld [vmem:[#allocation5 + $0x6c] sm:$0xf]
    %v92 = vld [vmem:[#allocation5 + $0x70] sm:$0xf]
    %v93 = vld [vmem:[#allocation5 + $0x74] sm:$0xf]
    %v94 = vld [vmem:[#allocation5 + $0x78] sm:$0xf]
    %v95 = vld [vmem:[#allocation5 + $0x7c] sm:$0xf]
    %v96 = vld [vmem:[#allocation5 + $0x80] sm:$0xf]
    %v97 = vld [vmem:[#allocation5 + $0x84] sm:$0xf]
    %v98 = vld [vmem:[#allocation5 + $0x88] sm:$0xf]
    %v99 = vld [vmem:[#allocation5 + $0x8c] sm:$0xf]
    %v100 = vld [vmem:[#allocation5 + $0x90] sm:$0xf]
    %v101 = vld [vmem:[#allocation5 + $0x94] sm:$0xf]
    %v102 = vld [vmem:[#allocation5 + $0x98] sm:$0xf]
    %v103 = vld [vmem:[#allocation5 + $0x9c] sm:$0xf]
    %v104 = vld [vmem:[#allocation5 + $0xa0] sm:$0xf]
    %v105 = vld [vmem:[#allocation5 + $0xa4] sm:$0xf]
    %v106 = vld [vmem:[#allocation5 + $0xa8] sm:$0xf]
    %v107 = vld [vmem:[#allocation5 + $0xac] sm:$0xf]
    %v108 = vld [vmem:[#allocation5 + $0xb0] sm:$0xf]
    %v109 = vld [vmem:[#allocation5 + $0xb4] sm:$0xf]
    %v110 = vld [vmem:[#allocation5 + $0xb8] sm:$0xf]
    %v111 = vld [vmem:[#allocation5 + $0xbc] sm:$0xf]
    %v128 = vunpack.c.l.b16 %v48
    %v129 = vunpack.c.h.b16 %v48
    %v130 = vunpack.c.l.b16 %v49
    %v131 = vunpack.c.l.b16 %v50
    %v132 = vunpack.c.h.b16 %v50
    %v133 = vunpack.c.l.b16 %v51
    %v134 = vunpack.c.l.b16 %v52
    %v135 = vunpack.c.h.b16 %v52
    %v136 = vunpack.c.l.b16 %v53
    %v137 = vunpack.c.l.b16 %v54
    %v138 = vunpack.c.h.b16 %v54
    %v139 = vunpack.c.l.b16 %v55
    %v140 = vunpack.c.l.b16 %v56
    %v141 = vunpack.c.h.b16 %v56
    %v142 = vunpack.c.l.b16 %v57
    %v143 = vunpack.c.l.b16 %v58
    %v144 = vunpack.c.h.b16 %v58
    %v145 = vunpack.c.l.b16 %v59
    %v146 = vunpack.c.l.b16 %v60
    %v147 = vunpack.c.h.b16 %v60
    %v148 = vunpack.c.l.b16 %v61
    %v149 = vunpack.c.l.b16 %v62
    %v150 = vunpack.c.h.b16 %v62
    %v151 = vunpack.c.l.b16 %v63
    %v152 = vpack.c.b16 %v131, %v128
    %v153 = vpack.c.b16 %v132, %v129
    %v154 = vpack.c.b16 %v133, %v130
    %v155 = vpack.c.b16 %v137, %v134
    %v156 = vpack.c.b16 %v138, %v135
    %v157 = vpack.c.b16 %v139, %v136
    %v158 = vpack.c.b16 %v143, %v140
    %v159 = vpack.c.b16 %v144, %v141
    %v160 = vpack.c.b16 %v145, %v142
    %v161 = vpack.c.b16 %v149, %v146
    %v162 = vpack.c.b16 %v150, %v147
    %v163 = vpack.c.b16 %v151, %v148
    %v224 = vunpack.c.l.b16 %v64
    %v225 = vunpack.c.l.b16 %v65
    %v226 = vunpack.c.l.b16 %v66
    %v227 = vunpack.c.l.b16 %v67
    %v228 = vunpack.c.l.b16 %v68
    %v229 = vunpack.c.l.b16 %v69
    %v230 = vunpack.c.l.b16 %v70
    %v231 = vunpack.c.l.b16 %v71
    %v232 = vunpack.c.l.b16 %v72
    %v233 = vunpack.c.l.b16 %v73
    %v234 = vunpack.c.l.b16 %v74
    %v235 = vunpack.c.l.b16 %v75
    %v236 = vunpack.c.l.b16 %v76
    %v237 = vunpack.c.l.b16 %v77
    %v238 = vunpack.c.l.b16 %v78
    %v239 = vunpack.c.l.b16 %v79
    %v240 = vunpack.c.l.b16 %v80
    %v241 = vunpack.c.l.b16 %v81
    %v242 = vunpack.c.l.b16 %v82
    %v243 = vunpack.c.l.b16 %v83
    %v244 = vunpack.c.l.b16 %v84
    %v245 = vunpack.c.l.b16 %v85
    %v246 = vunpack.c.l.b16 %v86
    %v247 = vunpack.c.l.b16 %v87
    %v248 = vunpack.c.l.b16 %v88
    %v249 = vunpack.c.l.b16 %v89
    %v250 = vunpack.c.l.b16 %v90
    %v251 = vunpack.c.l.b16 %v91
    %v252 = vunpack.c.l.b16 %v92
    %v253 = vunpack.c.l.b16 %v93
    %v254 = vunpack.c.l.b16 %v94
    %v255 = vunpack.c.l.b16 %v95
    %v256 = vunpack.c.l.b16 %v96
    %v257 = vunpack.c.l.b16 %v97
    %v258 = vunpack.c.l.b16 %v98
    %v259 = vunpack.c.l.b16 %v99
    %v260 = vunpack.c.l.b16 %v100
    %v261 = vunpack.c.l.b16 %v101
    %v262 = vunpack.c.l.b16 %v102
    %v263 = vunpack.c.l.b16 %v103
    %v264 = vunpack.c.l.b16 %v104
    %v265 = vunpack.c.l.b16 %v105
    %v266 = vunpack.c.l.b16 %v106
    %v267 = vunpack.c.l.b16 %v107
    %v268 = vunpack.c.l.b16 %v108
    %v269 = vunpack.c.l.b16 %v109
    %v270 = vunpack.c.l.b16 %v110
    %v271 = vunpack.c.l.b16 %v111
    %v272 = vpack.c.b16 %v225, %v224
    %v273 = vpack.c.b16 %v227, %v226
    %v274 = vpack.c.b16 %v229, %v228
    %v275 = vpack.c.b16 %v231, %v230
    %v276 = vpack.c.b16 %v233, %v232
    %v277 = vpack.c.b16 %v235, %v234
    %v278 = vpack.c.b16 %v237, %v236
    %v279 = vpack.c.b16 %v239, %v238
    %v280 = vpack.c.b16 %v241, %v240
    %v281 = vpack.c.b16 %v243, %v242
    %v282 = vpack.c.b16 %v245, %v244
    %v283 = vpack.c.b16 %v247, %v246
    %v284 = vpack.c.b16 %v249, %v248
    %v285 = vpack.c.b16 %v251, %v250
    %v286 = vpack.c.b16 %v253, %v252
    %v287 = vpack.c.b16 %v255, %v254
    %v288 = vpack.c.b16 %v257, %v256
    %v289 = vpack.c.b16 %v259, %v258
    %v290 = vpack.c.b16 %v261, %v260
    %v291 = vpack.c.b16 %v263, %v262
    %v292 = vpack.c.b16 %v265, %v264
    %v293 = vpack.c.b16 %v267, %v266
    %v294 = vpack.c.b16 %v269, %v268
    %v295 = vpack.c.b16 %v271, %v270
    %320 = vmatpush.bf16.msra.mxu0 %v279
    %321 = vmatpush.bf16.msra.mxu0 %v278
    %322 = vmatpush.bf16.msra.mxu0 %v277
    %323 = vmatpush.bf16.msra.mxu0 %v276
    %324 = vmatpush.bf16.msra.mxu0 %v275
    %325 = vmatpush.bf16.msra.mxu0 %v274
    %326 = vmatpush.bf16.msra.mxu0 %v273
    %327 = vmatpush.bf16.msra.mxu0 %v272
    %328 = vmatmul.bf16.gmra.mxu0 %v152
    %v329 = vpop.f32.mrf.mxu0
    %v330 = vadd.f32 0.0, %v329
    %v331 = vpop.f32.mrf.mxu0
    %v332 = vadd.f32 0.0, %v331
    %333 = vmatmul.bf16.gmra.mxu0 %v155
    %v334 = vpop.f32.mrf.mxu0
    %v335 = vadd.f32 0.0, %v334
    %v336 = vpop.f32.mrf.mxu0
    %v337 = vadd.f32 0.0, %v336
    %338 = vmatmul.bf16.gmra.mxu0 %v158
    %v339 = vpop.f32.mrf.mxu0
    %v340 = vadd.f32 0.0, %v339
    %v341 = vpop.f32.mrf.mxu0
    %v342 = vadd.f32 0.0, %v341
    %343 = vmatmul.bf16.gmra.mxu0 %v161
    %v344 = vpop.f32.mrf.mxu0
    %v345 = vadd.f32 0.0, %v344
    %v346 = vpop.f32.mrf.mxu0
    %v347 = vadd.f32 0.0, %v346
    %348 = vdwg.mxu0
    %349 = vmatpush.bf16.msra.mxu0 %v287
    %350 = vmatpush.bf16.msra.mxu0 %v286
    %351 = vmatpush.bf16.msra.mxu0 %v285
    %352 = vmatpush.bf16.msra.mxu0 %v284
    %353 = vmatpush.bf16.msra.mxu0 %v283
    %354 = vmatpush.bf16.msra.mxu0 %v282
    %355 = vmatpush.bf16.msra.mxu0 %v281
    %356 = vmatpush.bf16.msra.mxu0 %v280
    %357 = vmatmul.bf16.gmra.mxu0 %v153
    %v358 = vpop.f32.mrf.mxu0
    %v359 = vadd.f32 %v330, %v358
    %v360 = vpop.f32.mrf.mxu0
    %v361 = vadd.f32 %v332, %v360
    %362 = vmatmul.bf16.gmra.mxu0 %v156
    %v363 = vpop.f32.mrf.mxu0
    %v364 = vadd.f32 %v335, %v363
    %v365 = vpop.f32.mrf.mxu0
    %v366 = vadd.f32 %v337, %v365
    %367 = vmatmul.bf16.gmra.mxu0 %v159
    %v368 = vpop.f32.mrf.mxu0
    %v369 = vadd.f32 %v340, %v368
    %v370 = vpop.f32.mrf.mxu0
    %v371 = vadd.f32 %v342, %v370
    %372 = vmatmul.bf16.gmra.mxu0 %v162
    %v373 = vpop.f32.mrf.mxu0
    %v374 = vadd.f32 %v345, %v373
    %v375 = vpop.f32.mrf.mxu0
    %v376 = vadd.f32 %v347, %v375
    %377 = vdwg.mxu0
    %378 = vmatpush.bf16.msra.mxu0 %v295
    %379 = vmatpush.bf16.msra.mxu0 %v294
    %380 = vmatpush.bf16.msra.mxu0 %v293
    %381 = vmatpush.bf16.msra.mxu0 %v292
    %382 = vmatpush.bf16.msra.mxu0 %v291
    %383 = vmatpush.bf16.msra.mxu0 %v290
    %384 = vmatpush.bf16.msra.mxu0 %v289
    %385 = vmatpush.bf16.msra.mxu0 %v288
    %386 = vmatmul.bf16.gmra.mxu0 %v154
    %v387 = vpop.f32.mrf.mxu0
    %v388 = vadd.f32 %v359, %v387
    %v389 = vpop.f32.mrf.mxu0
    %v390 = vadd.f32 %v361, %v389
    %391 = vmatmul.bf16.gmra.mxu0 %v157
    %v392 = vpop.f32.mrf.mxu0
    %v393 = vadd.f32 %v364, %v392
    %v394 = vpop.f32.mrf.mxu0
    %v395 = vadd.f32 %v366, %v394
    %396 = vmatmul.bf16.gmra.mxu0 %v160
    %v397 = vpop.f32.mrf.mxu0
    %v398 = vadd.f32 %v369, %v397
    %v399 = vpop.f32.mrf.mxu0
    %v400 = vadd.f32 %v371, %v399
    %401 = vmatmul.bf16.gmra.mxu0 %v163
    %v402 = vpop.f32.mrf.mxu0
    %v403 = vadd.f32 %v374, %v402
    %v404 = vpop.f32.mrf.mxu0
    %v405 = vadd.f32 %v376, %v404
    %406 = vdwg.mxu0
    %v407 = vadd.f32 %v388, %v390
    %v408 = vadd.f32 %v407, %v393
    %v409 = vadd.f32 %v408, %v395
    %v410 = vadd.f32 %v409, %v398
    %v411 = vadd.f32 %v410, %v400
    %v412 = vadd.f32 %v411, %v403
    %v413 = vadd.f32 %v412, %v405
    %v414 = vrot.slane %v413, 4
    %v415 = vadd.f32 %v413, %v414
    %v416 = vrot.slane %v415, 2
    %v417 = vadd.f32 %v415, %v416
    %v418 = vrot.slane %v417, 1
    %v419 = vadd.f32 %v417, %v418
    %420 = vst [vmem:[#allocation8] sm:$0x1] %v419
    %v421 = vmul.f32 %v388, %v388
    %v422 = vmul.f32 %v390, %v390
    %v423 = vmul.f32 %v393, %v393
    %v424 = vmul.f32 %v395, %v395
    %v425 = vmul.f32 %v398, %v398
    %v426 = vmul.f32 %v400, %v400
    %v427 = vmul.f32 %v403, %v403
    %v428 = vmul.f32 %v405, %v405
    %v429 = vadd.f32 %v421, %v422
    %v430 = vadd.f32 %v429, %v423
    %v431 = vadd.f32 %v430, %v424
    %v432 = vadd.f32 %v431, %v425
    %v433 = vadd.f32 %v432, %v426
    %v434 = vadd.f32 %v433, %v427
    %v435 = vadd.f32 %v434, %v428
    %v436 = vrot.slane %v435, 4
    %v437 = vadd.f32 %v435, %v436
    %v438 = vrot.slane %v437, 2
    %v439 = vadd.f32 %v437, %v438
    %v440 = vrot.slane %v439, 1
    %v441 = vadd.f32 %v439, %v440
    %442 = vst [vmem:[#allocation10] sm:$0x1] %v441
    %v443 = vpack.c.bf16 %v388, %v388
    %v444 = vpack.c.bf16 %v390, %v390
    %v445 = vpack.c.bf16 %v393, %v393
    %v446 = vpack.c.bf16 %v395, %v395
    %v447 = vpack.c.bf16 %v398, %v398
    %v448 = vpack.c.bf16 %v400, %v400
    %v449 = vpack.c.bf16 %v403, %v403
    %v450 = vpack.c.bf16 %v405, %v405
    %451 = vst [vmem:[#allocation7] sm:$0xf] %v443
    %452 = vst [vmem:[#allocation7 + $0x4] sm:$0xf] %v444
    %453 = vst [vmem:[#allocation7 + $0x8] sm:$0xf] %v445
    %454 = vst [vmem:[#allocation7 + $0xc] sm:$0xf] %v446
    %455 = vst [vmem:[#allocation7 + $0x10] sm:$0xf] %v447
    %456 = vst [vmem:[#allocation7 + $0x14] sm:$0xf] %v448
    %457 = vst [vmem:[#allocation7 + $0x18] sm:$0xf] %v449
    %458 = vst [vmem:[#allocation7 + $0x1c] sm:$0xf] %v450
    // Predicated region
    $region18: #{tpu_custom_call.1} parent=1 // pred_check
      _
    $region19: #{tpu_custom_call.1} parent=1 // pred_check_branch
      %460 = sbr.rel (0) target = $region21
    $region20: #{tpu_custom_call.1} parent=1 // pred_region
      %462 = vsyncadd [#allocation4], 0
      %s463 = sshll.u32 [#allocation7], 4
      %s464 = int_to_ptr.vmem [resolvable:$true] %s463
      %s465 = sshll.u32 %s2, 4
      %s466 = int_to_ptr.hbm [resolvable:$true] %s465
      %471 = dma.vmem_to_hbm [thread:$0]  %s464, 512, %s466, [#allocation4], 64, 64, 4
    $region21: #{tpu_custom_call.1} parent=1 // pred_fallthru
      _
    // Predicated region
    $region22: #{tpu_custom_call.1} parent=1 // pred_check
      _
    $region23: #{tpu_custom_call.1} parent=1 // pred_check_branch
      %473 = sbr.rel (0) target = $region25
    $region24: #{tpu_custom_call.1} parent=1 // pred_region
      %475 = vsyncadd [#allocation9], 0
      %s477 = sshll.u32 [#allocation8], 4
      %s478 = int_to_ptr.vmem [resolvable:$true] %s477
      %s479 = sshll.u32 %s3, 4
      %s480 = int_to_ptr.hbm [resolvable:$true] %s479
      %482 = dma.vmem_to_hbm [thread:$0]  %s478, 16, %s480, [#allocation9]
    $region25: #{tpu_custom_call.1} parent=1 // pred_fallthru
      _
    // Predicated region
    $region26: #{tpu_custom_call.1} parent=1 // pred_check
      _
    $region27: #{tpu_custom_call.1} parent=1 // pred_check_branch
      %484 = sbr.rel (0) target = $region29
    $region28: #{tpu_custom_call.1} parent=1 // pred_region
      %486 = vsyncadd [#allocation9], 0
      %s488 = sshll.u32 [#allocation10], 4
      %s489 = int_to_ptr.vmem [resolvable:$true] %s488
      %s490 = sshll.u32 %s4, 4
      %s491 = int_to_ptr.hbm [resolvable:$true] %s490
      %493 = dma.vmem_to_hbm [thread:$0]  %s489, 16, %s491, [#allocation9]
    $region29: #{tpu_custom_call.1} parent=1 // pred_fallthru
      _
    // Predicated region
    $region30: #{tpu_custom_call.1} parent=1 // pred_check
      _
    $region31: #{tpu_custom_call.1} parent=1 // pred_check_branch
      %495 = sbr.rel (0) target = $region33
    $region32: #{tpu_custom_call.1} parent=1 // pred_region
      %497 = dma.done [#allocation4], 512
    $region33: #{tpu_custom_call.1} parent=1 // pred_fallthru
      _
    // Predicated region
    $region34: #{tpu_custom_call.1} parent=1 // pred_check
      _
    $region35: #{tpu_custom_call.1} parent=1 // pred_check_branch
      %499 = sbr.rel (0) target = $region37
    $region36: #{tpu_custom_call.1} parent=1 // pred_region
      %501 = dma.done [#allocation9], 16
    $region37: #{tpu_custom_call.1} parent=1 // pred_fallthru
      _
    // Predicated region
    $region38: #{tpu_custom_call.1} parent=1 // pred_check
      _
    $region39: #{tpu_custom_call.1} parent=1 // pred_check_branch
      %503 = sbr.rel (0) target = $region41
    $region40: #{tpu_custom_call.1} parent=1 // pred_region
      %505 = dma.done [#allocation9], 16
    $region41: #{tpu_custom_call.1} parent=1 // pred_fallthru
      _
    %506 = vsyncpa [#allocation3], 1
    %507 = vsyncpa [#allocation6], 1
    %508 = vsyncpa [#allocation4], 1
    %509 = vsyncpa [#allocation9], 1

</llo_original>
